<compile_context>
chip_gen: v5e
topology: v5e:2x2
jax: 0.10.0
libtpu: 0.0.40
codegen_flags: <defaults>
</compile_context>

<pallas_src>
import math
import functools
import numpy as np
import jax
import jax.numpy as jnp
from jax import lax
from jax.experimental import pallas as pl
from jax.experimental.pallas import tpu as pltpu


# ---------------------------------------------------------------------------
# Host-side 1-D interpolation matrices (align_corners=True), static numpy.
# ---------------------------------------------------------------------------
def _linear_coords(in_size: int, out_size: int):
    if out_size == 1:
        src = np.zeros((1,), dtype=np.float64)
    else:
        src = np.arange(out_size, dtype=np.float64) * (in_size - 1) / (out_size - 1)
    i0 = np.clip(np.floor(src).astype(np.int64), 0, in_size - 1)
    i1 = np.minimum(i0 + 1, in_size - 1)
    w = (src - i0).astype(np.float32)
    return i0, i1, w


def _interp_matrix(in_size: int, out_size: int) -> np.ndarray:
    """(in_size, out_size) matrix M such that out = in @ M (1-D linear)."""
    i0, i1, w = _linear_coords(in_size, out_size)
    m = np.zeros((in_size, out_size), dtype=np.float32)
    cols = np.arange(out_size)
    np.add.at(m, (i0, cols), 1.0 - w)
    np.add.at(m, (i1, cols), w)
    return m


# ---------------------------------------------------------------------------
# Kernels
# ---------------------------------------------------------------------------
def _resize_kernel_kron(x_ref, md_ref, mhw_ref, o_ref, *, C, TDo, HW, HoWo):
    """Main path: depth pass (batched over C) then a single fused H+W matmul.

    Lane dim stays H*W -> Ho*Wo; no in-kernel broadcasts or lane relayouts.
    """
    x = x_ref[0].astype(jnp.float32)                     # (C, D, H*W)
    md = md_ref[...]                                     # (C, TDo, D), host-replicated
    # Depth pass first: nothing is recomputed across output-depth tiles.
    t = lax.dot_general(md, x, (((2,), (1,)), ((0,), (0,))),
                        preferred_element_type=jnp.float32)          # (C, TDo, H*W)
    t = t.reshape(C * TDo, HW)                           # fold C into M (lane unchanged)
    # Fused H+W pass: one MXU matmul with K = H*W (kron(M_H, M_W)).
    out = jnp.dot(t, mhw_ref[...], preferred_element_type=jnp.float32)  # (C*TDo, Ho*Wo)
    # Single lane-dense block store.
    o_ref[...] = out.reshape(1, C, TDo, HoWo).astype(o_ref.dtype)


def _resize_kernel_sep(x_ref, md_ref, mw_ref, mh_ref, o_ref, a_ref, *, TDo, H, W, Wo):
    """Fallback path for large volumes: separable passes, looped H pass (no broadcast)."""
    x = x_ref[0, 0].astype(jnp.float32)                              # (D, H*W)
    # Depth pass first so nothing is recomputed across output-depth tiles.
    t = jnp.dot(md_ref[...], x, preferred_element_type=jnp.float32)  # (TDo, H*W)
    # W pass. TODO(synk): this reshape changes the lane dim (H*W -> W); pad W/Wo
    # to multiples of 128 in the wrapper to make the relayout free at scale.
    t = jnp.dot(t.reshape(TDo * H, W), mw_ref[...],
                preferred_element_type=jnp.float32)                   # (TDo*H, Wo)
    a_ref[...] = t.reshape(TDo, H, Wo)
    mh = mh_ref[...]                                                  # (Ho, H)

    # H pass as a loop over the depth batch (review option (b)): no mh broadcast,
    # each iteration is a dense (Ho, H) @ (H, Wo) MXU matmul written lane-dense.
    def h_body(i, carry):
        o_ref[0, 0, i] = jnp.dot(mh, a_ref[i],
                                 preferred_element_type=jnp.float32).astype(o_ref.dtype)
        return carry

    lax.fori_loop(0, TDo, h_body, 0)


# ---------------------------------------------------------------------------
# Wrapper
# ---------------------------------------------------------------------------
def _vmem_limit_bytes() -> int:
    try:
        cap = pltpu.get_tpu_info().vmem_capacity_bytes
    except Exception:
        cap = 64 * 1024 * 1024            # conservative default (v7x per-core VMEM)
    return int(cap * 3 // 4)              # ~25% headroom for buffers / internal scratch


def _pick_do_tile(Do, fixed_bytes, per_row_bytes, budget):
    """Largest output-depth tile (full Do, or a multiple of 8) fitting the budget."""
    if fixed_bytes + per_row_bytes * Do <= budget:
        return Do
    rows = (budget - fixed_bytes) // max(1, per_row_bytes) if budget > fixed_bytes else 0
    rows = max(8, (int(rows) // 8) * 8)
    return int(min(Do, rows))


def resize_transformer_block(x, resize_factor, mode="trilinear", *,
                             kron_bytes_limit=8 * 1024 * 1024,
                             max_tile_do=None):
    """Pallas TPU implementation of ResizeTransformer_block.forward (5-D NCDHW)."""
    # TODO(synk): only the default mode='trilinear' path is implemented.
    assert mode == "trilinear", "only mode='trilinear' (5-D NCDHW) is implemented"
    factor = float(resize_factor)
    if factor == 1.0:
        return x

    N, C, D, H, W = x.shape
    # Clamp so tiny volumes with factor < 1 never produce a zero-sized axis.
    Do = max(1, int(math.floor(D * factor)))
    Ho = max(1, int(math.floor(H * factor)))
    Wo = max(1, int(math.floor(W * factor)))
    HW, HoWo = H * W, Ho * Wo
    x_is = jnp.dtype(x.dtype).itemsize

    vmem_limit = _vmem_limit_bytes()
    budget = int(vmem_limit * 0.8)        # slack for compiler-internal scratch

    # `factor` folded into the depth matrix (exact by linearity; matches both the
    # pre-scale (factor>1) and post-scale (factor<1) orderings of the module).
    md = (_interp_matrix(D, Do).T * np.float32(factor)).astype(np.float32)   # (Do, D)

    use_kron = HW * HoWo * 4 <= kron_bytes_limit

    if use_kron:
        # --- main path: fused H+W pass via kron(M_H, M_W), C folded into block ---
        mhw = np.kron(_interp_matrix(H, Ho), _interp_matrix(W, Wo))          # (HW, HoWo)
        md_b = np.ascontiguousarray(np.broadcast_to(md, (C, Do, D)))         # tiny

        fixed = 2 * C * D * HW * x_is + 2 * HW * HoWo * 4
        per_row = C * (2 * D * 4 + 2 * HoWo * x_is + HW * 4 + HoWo * 4)
        TDo = _pick_do_tile(Do, fixed, per_row, budget)
        if max_tile_do is not None:
            TDo = min(TDo, int(max_tile_do))
        n_tiles = pl.cdiv(Do, TDo)

        kernel = functools.partial(_resize_kernel_kron, C=C, TDo=TDo, HW=HW, HoWo=HoWo)
        out = pl.pallas_call(
            kernel,
            out_shape=jax.ShapeDtypeStruct((N, C, Do, HoWo), x.dtype),
            grid_spec=pltpu.PrefetchScalarGridSpec(
                num_scalar_prefetch=0,
                grid=(N, n_tiles),          # Do tiles innermost: x fetched once per n
                in_specs=[
                    pl.BlockSpec((1, C, D, HW), lambda n, k: (n, 0, 0, 0)),
                    pl.BlockSpec((C, TDo, D), lambda n, k: (0, k, 0)),
                    pl.BlockSpec((HW, HoWo), lambda n, k: (0, 0)),
                ],
                out_specs=pl.BlockSpec((1, C, TDo, HoWo), lambda n, k: (n, 0, k, 0)),
            ),
            compiler_params=pltpu.CompilerParams(
                dimension_semantics=("parallel", "parallel"),
                vmem_limit_bytes=vmem_limit),
        )(x.reshape(N, C, D, HW), jnp.asarray(md_b), jnp.asarray(mhw))
        return out.reshape(N, C, Do, Ho, Wo)

    # --- fallback path (large volumes where the kron matrix would be too big) ---
    # TODO(synk): for huge downsampling inputs also band the *input* depth via
    # manual DMA instead of loading the full (D, H*W) slab per grid step.
    mw = _interp_matrix(W, Wo)                                  # (W, Wo)
    mh = np.ascontiguousarray(_interp_matrix(H, Ho).T)          # (Ho, H)

    fixed = 2 * D * HW * x_is + 2 * W * Wo * 4 + 2 * Ho * H * 4
    per_row = 2 * D * 4 + 2 * HoWo * x_is + HW * 4 + 2 * H * Wo * 4
    TDo = _pick_do_tile(Do, fixed, per_row, budget)
    if max_tile_do is not None:
        TDo = min(TDo, int(max_tile_do))
    n_tiles = pl.cdiv(Do, TDo)

    kernel = functools.partial(_resize_kernel_sep, TDo=TDo, H=H, W=W, Wo=Wo)
    out = pl.pallas_call(
        kernel,
        out_shape=jax.ShapeDtypeStruct((N, C, Do, Ho, Wo), x.dtype),
        grid_spec=pltpu.PrefetchScalarGridSpec(
            num_scalar_prefetch=0,
            grid=(N, C, n_tiles),
            in_specs=[
                pl.BlockSpec((1, 1, D, HW), lambda n, c, k: (n, c, 0, 0)),
                pl.BlockSpec((TDo, D), lambda n, c, k: (k, 0)),
                pl.BlockSpec((W, Wo), lambda n, c, k: (0, 0)),
                pl.BlockSpec((Ho, H), lambda n, c, k: (0, 0)),
            ],
            out_specs=pl.BlockSpec((1, 1, TDo, Ho, Wo),
                                   lambda n, c, k: (n, c, k, 0, 0)),
            scratch_shapes=[pltpu.VMEM((TDo, H, Wo), jnp.float32)],
        ),
        compiler_params=pltpu.CompilerParams(
            dimension_semantics=("parallel", "parallel", "parallel"),
            vmem_limit_bytes=vmem_limit),
    )(x.reshape(N, C, D, HW), jnp.asarray(md), jnp.asarray(mw), jnp.asarray(mh))
    return out


# ---------------------------------------------------------------------------
# Pure numpy reference (torch trilinear, align_corners=True) and tests.
# ---------------------------------------------------------------------------
def _reference(x, factor):
    x = np.asarray(x, dtype=np.float64)
    N, C, D, H, W = x.shape
    Do = max(1, int(math.floor(D * factor)))
    Ho = max(1, int(math.floor(H * factor)))
    Wo = max(1, int(math.floor(W * factor)))
    if factor > 1:
        x = factor * x
    i0d, i1d, wd = _linear_coords(D, Do)
    i0h, i1h, wh = _linear_coords(H, Ho)
    i0w, i1w, ww = _linear_coords(W, Wo)
    wd = wd.astype(np.float64)[:, None, None]
    wh = wh.astype(np.float64)[None, :, None]
    ww = ww.astype(np.float64)[None, None, :]

    def g(id_, ih_, iw_):
        return x[:, :, id_[:, None, None], ih_[None, :, None], iw_[None, None, :]]

    out = (g(i0d, i0h, i0w) * (1 - wd) * (1 - wh) * (1 - ww)
           + g(i0d, i0h, i1w) * (1 - wd) * (1 - wh) * ww
           + g(i0d, i1h, i0w) * (1 - wd) * wh * (1 - ww)
           + g(i0d, i1h, i1w) * (1 - wd) * wh * ww
           + g(i1d, i0h, i0w) * wd * (1 - wh) * (1 - ww)
           + g(i1d, i0h, i1w) * wd * (1 - wh) * ww
           + g(i1d, i1h, i0w) * wd * wh * (1 - ww)
           + g(i1d, i1h, i1w) * wd * wh * ww)
    if factor < 1:
        out = factor * out
    return out


if __name__ == "__main__":
    key = jax.random.PRNGKey(0)
    k1, k2 = jax.random.split(key)

    # 1) Upsample x2 (main kron path).
    x_up = jax.random.normal(k1, (2, 3, 8, 8, 8), dtype=jnp.float32)
    y = jax.block_until_ready(resize_transformer_block(x_up, 2.0))
    assert y.shape == (2, 3, 16, 16, 16)
    np.testing.assert_allclose(np.asarray(y), _reference(x_up, 2.0), rtol=1e-4, atol=1e-4)

    # 2) Downsample x0.5 (main kron path).
    x_dn = jax.random.normal(k2, (2, 3, 16, 16, 16), dtype=jnp.float32)
    y = jax.block_until_ready(resize_transformer_block(x_dn, 0.5))
    assert y.shape == (2, 3, 8, 8, 8)
    np.testing.assert_allclose(np.asarray(y), _reference(x_dn, 0.5), rtol=1e-4, atol=1e-4)

    # 3) Large-volume fallback path (separable + looped H pass), forced.
    y = jax.block_until_ready(resize_transformer_block(x_up, 2.0, kron_bytes_limit=0))
    np.testing.assert_allclose(np.asarray(y), _reference(x_up, 2.0), rtol=1e-4, atol=1e-4)

    # 4) Output-depth tiling with a partial last tile (Do=12, TDo=8), both paths.
    y = jax.block_until_ready(resize_transformer_block(x_up, 1.5, max_tile_do=8))
    assert y.shape == (2, 3, 12, 12, 12)
    np.testing.assert_allclose(np.asarray(y), _reference(x_up, 1.5), rtol=1e-4, atol=1e-4)
    y = jax.block_until_ready(resize_transformer_block(x_up, 1.5, kron_bytes_limit=0,
                                                       max_tile_do=8))
    np.testing.assert_allclose(np.asarray(y), _reference(x_up, 1.5), rtol=1e-4, atol=1e-4)

    # 5) factor == 1 identity path.
    assert resize_transformer_block(x_up, 1.0) is x_up

    print("KERNEL_OK")
</pallas_src>

<mosaic_0001>
module attributes {stable_mosaic.version = 11 : i64} {
  func.func @_resize_kernel_kron(%arg0: i32, %arg1: i32, %arg2: memref<1x3x8x64xf32, #tpu.memory_space<vmem>>, %arg3: memref<3x16x8xf32, #tpu.memory_space<vmem>>, %arg4: memref<64x256xf32, #tpu.memory_space<vmem>>, %arg5: memref<1x3x16x256xf32, #tpu.memory_space<vmem>>) attributes {dimension_semantics = [#tpu.dimension_semantics<parallel>, #tpu.dimension_semantics<parallel>], iteration_bounds = array<i64: 2, 1>, scalar_prefetch = 0 : i64, scratch_operands = 0 : i64, tpu.core_type = #tpu.core_type<tc>, window_params = [{transform_indices = @transform_0, window_bounds = array<i64: 1, 3, 8, 64>}, {transform_indices = @transform_1, window_bounds = array<i64: 3, 16, 8>}, {pipeline_mode = #tpu.pipeline_mode<synchronous>, transform_indices = @transform_2, window_bounds = array<i64: 64, 256>}, {transform_indices = @transform_3, window_bounds = array<i64: 1, 3, 16, 256>}]} {
    %c0 = arith.constant 0 : index
    %c0_0 = arith.constant 0 : index
    %c0_1 = arith.constant 0 : index
    %c0_2 = arith.constant 0 : index
    %0 = vector.load %arg2[%c0, %c0_0, %c0_1, %c0_2] : memref<1x3x8x64xf32, #tpu.memory_space<vmem>>, vector<1x3x8x64xf32>
    %1 = vector.shape_cast %0 : vector<1x3x8x64xf32> to vector<3x8x64xf32>
    %c0_3 = arith.constant 0 : index
    %c0_4 = arith.constant 0 : index
    %c0_5 = arith.constant 0 : index
    %2 = vector.load %arg3[%c0_3, %c0_4, %c0_5] : memref<3x16x8xf32, #tpu.memory_space<vmem>>, vector<3x16x8xf32>
    %cst = arith.constant dense<0.000000e+00> : vector<3x16x64xf32>
    %3 = tpu.matmul %2, %1, %cst {dimension_numbers = #tpu.dot_dimension_numbers<[2], [1], [1], [2], [0, 0, 0, 1, 1, 2], [0], [0]>} : vector<3x16x8xf32>, vector<3x8x64xf32>, vector<3x16x64xf32> -> vector<3x16x64xf32>
    %4 = vector.shape_cast %3 : vector<3x16x64xf32> to vector<48x64xf32>
    %c0_6 = arith.constant 0 : index
    %c0_7 = arith.constant 0 : index
    %5 = vector.load %arg4[%c0_6, %c0_7] : memref<64x256xf32, #tpu.memory_space<vmem>>, vector<64x256xf32>
    %cst_8 = arith.constant dense<0.000000e+00> : vector<48x256xf32>
    %6 = tpu.matmul %4, %5, %cst_8 {dimension_numbers = #tpu.dot_dimension_numbers<[1], [0], [0], [1], [0, 0, 1, 1], [], []>} : vector<48x64xf32>, vector<64x256xf32>, vector<48x256xf32> -> vector<48x256xf32>
    %7 = vector.shape_cast %6 : vector<48x256xf32> to vector<1x3x16x256xf32>
    %c0_9 = arith.constant 0 : index
    %c0_10 = arith.constant 0 : index
    %c0_11 = arith.constant 0 : index
    %c0_12 = arith.constant 0 : index
    %8 = vector.load %arg5[%c0_9, %c0_10, %c0_11, %c0_12] : memref<1x3x16x256xf32, #tpu.memory_space<vmem>>, vector<1x3x16x256xf32>
    tpu.vector_store %arg5[%c0_9, %c0_10, %c0_11, %c0_12], %7 {strides = array<i32>} : memref<1x3x16x256xf32, #tpu.memory_space<vmem>>, vector<1x3x16x256xf32>,
    return
  }
  func.func @transform_0(%arg0: i32, %arg1: i32) -> (i32, i32, i32, i32) {
    %c0_i32 = arith.constant 0 : i32
    %c0_i32_0 = arith.constant 0 : i32
    %c0_i32_1 = arith.constant 0 : i32
    %c0_i32_2 = arith.constant 0 : i32
    return %arg0, %c0_i32, %c0_i32_0, %c0_i32_1 : i32, i32, i32, i32
  }
  func.func @transform_1(%arg0: i32, %arg1: i32) -> (i32, i32, i32) {
    %c0_i32 = arith.constant 0 : i32
    %c0_i32_0 = arith.constant 0 : i32
    %c0_i32_1 = arith.constant 0 : i32
    return %c0_i32, %arg1, %c0_i32_0 : i32, i32, i32
  }
  func.func @transform_2(%arg0: i32, %arg1: i32) -> (i32, i32) {
    %c0_i32 = arith.constant 0 : i32
    %c0_i32_0 = arith.constant 0 : i32
    %c0_i32_1 = arith.constant 0 : i32
    return %c0_i32, %c0_i32_0 : i32, i32
  }
  func.func @transform_3(%arg0: i32, %arg1: i32) -> (i32, i32, i32, i32) {
    %c0_i32 = arith.constant 0 : i32
    %c0_i32_0 = arith.constant 0 : i32
    %c0_i32_1 = arith.constant 0 : i32
    return %arg0, %c0_i32, %arg1, %c0_i32_0 : i32, i32, i32, i32
  }
}

</mosaic_0001>

<llo_original>
// kernel: tpu_custom_call.1
$region0: #{tpu_custom_call.1}
  #allocation0 [shape = 'u32[]', space=smem, size = 0x4, offset = 0x4, fixed_abs, tag = 'smem constant byte address 0x4 - core index']
  #allocation1 [shape = 'u32[72,128]{1,0:T(1,128)}', space=vmem, size = 0x9000, scoped, tag = 'internal scratch']
  %s0 = inlined_call_operand.vmem [shape: f32[2,3,8,64], index: 0, kind: input, shape index: {}]
  %s1 = inlined_call_operand.vmem [shape: f32[3,16,8], index: 1, kind: input, shape index: {}]
  %s2 = inlined_call_operand.hbm [shape: f32[64,256], index: 2, kind: input, shape index: {}]
  %s3 = inlined_call_operand.hbm [shape: f32[2,3,16,256], index: 3, kind: output, shape index: {}]
  %s4 = sld [smem:[#allocation0]]
  $region49: #{tpu_custom_call.1} parent=0
    _
  %s6 = ssub.s32 1, %s4
  %s7 = scalar_select 0, %s6, %s4
  $region1: #{tpu_custom_call.1} parent=0
    #allocation2 [shape = 'u8[65536]{0}', space=vmem, size = 0x10000, scoped, tag = 'input window, operand 2, single buffered']
    #allocation3 [shape = 's32[2]{0}', space=sflag, size = 0x8, scoped, tag = 'scoped memory for tpu_custom_call.1']
    #allocation4 [shape = 's32[2]{0}', space=sflag, size = 0x8, scoped, tag = 'scoped memory for tpu_custom_call.1']
    #allocation5 [shape = 'u8[98304]{0}', space=vmem, size = 0x18000, scoped, tag = 'output window, operand 0']
    %8 = vsyncpa [#allocation3], 0
    %9 = vsyncpa [#allocation4], 0
    %s10 = scalar_lea.sflag [#allocation4], 1
    %11 = vsyncpa %s10, 0
    loop: start=0, step=1, limit=4
    $region2: #{tpu_custom_call.1} parent=1 // loop_pre_header
      _
    $region3: #{tpu_custom_call.1} parent=1 // loop_header
      %s13 = sphi 0, %s17
      %p14 = scmp.ge.s32.totalorder %s13, 4
      %s20 = sphi 0, %s32
      %s21 = sphi 0, %s28
      %s22 = sphi 0, %s20
      %s23 = sphi 0, %s21
      %s24 = sphi 0, %s22
      %s25 = sphi 0, %s23
      %s35 = sphi 0, %s37
      %s38 = sphi 0, %s35
      %s39 = sphi 0, %s38
      %s55 = sphi 0, %s39
      %s61 = sphi 0, %s63
      %s64 = sphi 0, %s61
      %s65 = sphi 0, %s64
      %s81 = sphi 0, %s65
      %s85 = sphi 0, %s85
      %s87 = sphi 0, %s85
      %s88 = sphi 0, %s87
      %s102 = sphi 0, %s88
      %s110 = sphi 0, %s112
      %s113 = sphi 0, %s110
      %s114 = sphi 0, %s113
      %s130 = sphi 0, %s114
    $region4: #{tpu_custom_call.1} parent=1 // loop_header_branch
      %16 = sbr.rel (%p14) target = $region8
    $region5: #{tpu_custom_call.1} parent=1 // loop_body
      %s18 = ssub.s32 %s13, 1
      %s19 = ssub.s32 %s13, 2
      %s26 = sadd.s32 1, %s21
      %p27 = scmp.ge.s32.totalorder %s26, 1
      %s28 = scalar_select %p27, 0, %s26
      %s29 = sadd.s32 1, %s20
      %s30 = scalar_select %p27, %s29, %s20
      %p31 = scmp.ge.s32.totalorder %s30, 2
      %s32 = scalar_select %p31, 0, %s30
      %s33 = ssub.s32 %s20, %s32
      %p34 = scmp.eq.s32.totalorder %s33, 0
      %s36 = sadd.s32 %s35, 1
      %s37 = scalar_select %p34, %s35, %s36
      %p40 = pneg %p34
      %p41 = scmp.eq.s32.totalorder %s13, 1
      %p42 = por %p40, %p41
      %p43 = scmp.ne.s32.totalorder %s35, %s38
      %p44 = scmp.eq.s32.totalorder %s13, 0
      %p45 = por %p43, %p44
      %p46 = scmp.ne.s32.totalorder %s35, %s38
      %p47 = scmp.eq.s32.totalorder %s18, 1
      %p48 = por %p46, %p47
      %p49 = scmp.ne.s32.totalorder %s38, %s39
      %p50 = scmp.eq.s32.totalorder %s18, 0
      %p51 = por %p49, %p50
      %p52 = scmp.ne.s32.totalorder %s38, %s39
      %p53 = scmp.eq.s32.totalorder %s19, 1
      %p54 = por %p52, %p53
      %p56 = scmp.ne.s32.totalorder %s39, %s55
      %p57 = scmp.eq.s32.totalorder %s19, 0
      %p58 = por %p56, %p57
      %s59 = ssub.s32 %s21, %s28
      %p60 = scmp.eq.s32.totalorder %s59, 0
      %s62 = sadd.s32 %s61, 1
      %s63 = scalar_select %p60, %s61, %s62
      %p66 = pneg %p60
      %p67 = scmp.eq.s32.totalorder %s13, 1
      %p68 = por %p66, %p67
      %p69 = scmp.ne.s32.totalorder %s61, %s64
      %p70 = scmp.eq.s32.totalorder %s13, 0
      %p71 = por %p69, %p70
      %p72 = scmp.ne.s32.totalorder %s61, %s64
      %p73 = scmp.eq.s32.totalorder %s18, 1
      %p74 = por %p72, %p73
      %p75 = scmp.ne.s32.totalorder %s64, %s65
      %p76 = scmp.eq.s32.totalorder %s18, 0
      %p77 = por %p75, %p76
      %p78 = scmp.ne.s32.totalorder %s64, %s65
      %p79 = scmp.eq.s32.totalorder %s19, 1
      %p80 = por %p78, %p79
      %p82 = scmp.ne.s32.totalorder %s65, %s81
      %p83 = scmp.eq.s32.totalorder %s19, 0
      %p84 = por %p82, %p83
      %s86 = sadd.s32 %s85, 1
      %p89 = scmp.eq.s32.totalorder %s13, 1
      %p90 = scmp.ne.s32.totalorder %s85, %s87
      %p91 = scmp.eq.s32.totalorder %s13, 0
      %p92 = por %p90, %p91
      %p93 = scmp.ne.s32.totalorder %s85, %s87
      %p94 = scmp.eq.s32.totalorder %s18, 1
      %p95 = por %p93, %p94
      %p96 = scmp.ne.s32.totalorder %s87, %s88
      %p97 = scmp.eq.s32.totalorder %s18, 0
      %p98 = por %p96, %p97
      %p99 = scmp.ne.s32.totalorder %s87, %s88
      %p100 = scmp.eq.s32.totalorder %s19, 1
      %p101 = por %p99, %p100
      %p103 = scmp.ne.s32.totalorder %s88, %s102
      %p104 = scmp.eq.s32.totalorder %s19, 0
      %p105 = por %p103, %p104
      %s106 = ssub.s32 %s20, %s32
      %s107 = ssub.s32 %s21, %s28
      %s108 = sor.u32 %s106, %s107
      %p109 = scmp.eq.s32.totalorder %s108, 0
      %s111 = sadd.s32 %s110, 1
      %s112 = scalar_select %p109, %s110, %s111
      %p115 = pneg %p109
      %p116 = scmp.eq.s32.totalorder %s13, 1
      %p117 = por %p115, %p116
      %p118 = scmp.ne.s32.totalorder %s110, %s113
      %p119 = scmp.eq.s32.totalorder %s13, 0
      %p120 = por %p118, %p119
      %p121 = scmp.ne.s32.totalorder %s110, %s113
      %p122 = scmp.eq.s32.totalorder %s18, 1
      %p123 = por %p121, %p122
      %p124 = scmp.ne.s32.totalorder %s113, %s114
      %p125 = scmp.eq.s32.totalorder %s18, 0
      %p126 = por %p124, %p125
      %p127 = scmp.ne.s32.totalorder %s113, %s114
      %p128 = scmp.eq.s32.totalorder %s19, 1
      %p129 = por %p127, %p128
      %p131 = scmp.ne.s32.totalorder %s114, %s130
      %p132 = scmp.eq.s32.totalorder %s19, 0
      %p133 = por %p131, %p132
      %p134 = scmp.le.s32.totalorder 1, %s13
      %p135 = scmp.lt.s32.totalorder %s13, 3
      %p136 = pnand %p134, %p135
      %p137 = pneg %p136
      // Predicated region
      $region9: #{tpu_custom_call.1} parent=5 // pred_check
        _
      $region10: #{tpu_custom_call.1} parent=5 // pred_check_branch
        %139 = sbr.rel (%p136) target = $region12
      $region11: #{tpu_custom_call.1} parent=5 // pred_region
        %s140 = ssub.s32 %s13, 1
        // Predicated region
        $region13: #{tpu_custom_call.1} parent=11 // pred_check
          %p141 = pneg %p77
        $region14: #{tpu_custom_call.1} parent=11 // pred_check_branch
          %143 = sbr.rel (%p141) target = $region16
        $region15: #{tpu_custom_call.1} parent=11 // pred_region
          %s144 = smul.u32 2, %s23
          %p145 = scmp.lt.s32.totalorder %s144, 1
          %s146 = scalar_select %p145, %s144, 1
          %s147 = smul.addr %s146, 8
          %s148 = scalar_lea.vmem %s1, %s147
          %s149 = smul.u32 2, %s23
        $region16: #{tpu_custom_call.1} parent=11 // pred_fallthru
          _
        // Predicated region
        $region17: #{tpu_custom_call.1} parent=11 // pred_check
          %p150 = pneg %p98
        $region18: #{tpu_custom_call.1} parent=11 // pred_check_branch
          %152 = sbr.rel (%p150) target = $region20
        $region19: #{tpu_custom_call.1} parent=11 // pred_region
          %154 = vsyncadd [#allocation3], 0
          %s155 = sshll.u32 %s2, 4
          %s156 = int_to_ptr.hbm [resolvable:$true] %s155
          %s157 = sshll.u32 [#allocation2], 4
          %s158 = int_to_ptr.vmem [resolvable:$true] %s157
          %163 = dma.hbm_to_vmem [thread:$0]  %s156, 2048, %s158, [#allocation3], 256, 256, 16
        $region20: #{tpu_custom_call.1} parent=11 // pred_fallthru
          _
      $region12: #{tpu_custom_call.1} parent=5 // pred_fallthru
        _
      %p164 = scmp.lt.s32.totalorder %s13, 2
      // Predicated region
      $region21: #{tpu_custom_call.1} parent=5 // pred_check
        %p165 = pneg %p164
      $region22: #{tpu_custom_call.1} parent=5 // pred_check_branch
        %167 = sbr.rel (%p165) target = $region24
      $region23: #{tpu_custom_call.1} parent=5 // pred_region
        // Predicated region
        $region25: #{tpu_custom_call.1} parent=23 // pred_check
          %p168 = pneg %p45
        $region26: #{tpu_custom_call.1} parent=23 // pred_check_branch
          %170 = sbr.rel (%p168) target = $region28
        $region27: #{tpu_custom_call.1} parent=23 // pred_region
          %p171 = scmp.lt.s32.totalorder %s20, 1
          %s172 = scalar_select %p171, %s20, 1
          %s173 = smul.addr %s172, 3
          %s174 = smul.addr %s173, 8
          %s175 = scalar_lea.vmem %s0, %s174
        $region28: #{tpu_custom_call.1} parent=23 // pred_fallthru
          _
      $region24: #{tpu_custom_call.1} parent=5 // pred_fallthru
        _
      %p176 = scmp.le.s32.totalorder 1, %s13
      %p177 = scmp.lt.s32.totalorder %s13, 3
      %p178 = pnand %p176, %p177
      %p179 = pneg %p178
      // Predicated region
      $region29: #{tpu_custom_call.1} parent=5 // pred_check
        _
      $region30: #{tpu_custom_call.1} parent=5 // pred_check_branch
        %181 = sbr.rel (%p178) target = $region32
      $region31: #{tpu_custom_call.1} parent=5 // pred_region
        %s182 = ssub.s32 %s13, 1
        // Predicated region
        $region33: #{tpu_custom_call.1} parent=31 // pred_check
          %p183 = pneg %p98
        $region34: #{tpu_custom_call.1} parent=31 // pred_check_branch
          %185 = sbr.rel (%p183) target = $region36
        $region35: #{tpu_custom_call.1} parent=31 // pred_region
          %187 = dma.done [#allocation3], 2048
        $region36: #{tpu_custom_call.1} parent=31 // pred_fallthru
          _
        %p188 = scmp.lt.s32.totalorder %s22, 1
        %s189 = scalar_select %p188, %s22, 1
        %s190 = smul.addr %s189, 3
        %s191 = smul.addr %s190, 8
        %s192 = scalar_lea.vmem %s0, %s191
        %p193 = pneg %p51
        %p194 = pneg %p48
        %s195 = smul.u32 2, %s23
        %p196 = scmp.lt.s32.totalorder %s195, 1
        %s197 = scalar_select %p196, %s195, 1
        %s198 = smul.addr %s197, 8
        %s199 = scalar_lea.vmem %s1, %s198
        %p200 = pneg %p77
        %p201 = pneg %p74
        %p202 = pneg %p98
        %p203 = pneg %p95
        %p204 = pneg %p126
        %p205 = pneg %p123
        %s206 = sand.u32 %s113, 1
        %s207 = scalar_lea.sflag [#allocation4], %s206
        %s208 = sand.u32 %s113, 1
        %s209 = smul.addr %s208, 96
        %s210 = scalar_lea.vmem [#allocation5], %s209
        %p211 = scmp.lt.s32.totalorder %s22, 1
        %s212 = scalar_select %p211, %s22, 1
        %s213 = smul.addr %s212, 3
        %s214 = smul.addr %s213, 8
        %s215 = scalar_lea.vmem %s0, %s214
        %s216 = smul.u32 2, %s23
        %p217 = scmp.lt.s32.totalorder %s216, 1
        %s218 = scalar_select %p217, %s216, 1
        %s219 = smul.addr %s218, 8
        %s220 = scalar_lea.vmem %s1, %s219
        %s221 = smul.u32 2, %s23
        %s222 = smul.u32 2, %s23
        %v223 = vld [vmem:[%s215] sm:$0xff]
        %v224 = vld [vmem:[%s215 + $0x8] sm:$0xff]
        %v225 = vld [vmem:[%s215 + $0x10] sm:$0xff]
        %v226 = vld [vmem:[%s220] sm:$0xff]
        %v227 = vld [vmem:[%s220 + $0x8] sm:$0xff]
        %v228 = vld [vmem:[%s220 + $0x10] sm:$0xff]
        %v229 = vld [vmem:[%s220 + $0x18] sm:$0xff]
        %v230 = vld [vmem:[%s220 + $0x20] sm:$0xff]
        %v231 = vld [vmem:[%s220 + $0x28] sm:$0xff]
        %vm232 = vcmask 64512
        %v234 = vsel %vm232, %v226, 0
        %v237 = vsel %vm232, %v227, 0
        %239 = vmatpush.msra.mxu0 0.0
        %240 = vmatpush.msra.mxu0 0.0
        %241 = vmatpush.msra.mxu0 0.0
        %242 = vmatpush.msra.mxu0 0.0
        %243 = vmatpush.msra.mxu0 0.0
        %244 = vmatpush.msra.mxu0 0.0
        %245 = vmatpush.msra.mxu0 0.0
        %246 = vmatpush.msra.mxu0 0.0
        %247 = vmatpush.msra.mxu0 0.0
        %248 = vmatpush.msra.mxu0 0.0
        %249 = vmatpush.msra.mxu0 0.0
        %250 = vmatpush.msra.mxu0 0.0
        %251 = vmatpush.msra.mxu0 0.0
        %252 = vmatpush.msra.mxu0 0.0
        %253 = vmatpush.msra.mxu0 0.0
        %254 = vmatpush.msra.mxu0 %v223
        %255 = vmatmul.f32.gmra.mxu0 %v234
        %v256 = vpop.f32.mrf.mxu0
        %v257 = vadd.f32 0.0, %v256
        %258 = vmatmul.f32.gmra.mxu0 %v237
        %v259 = vpop.f32.mrf.mxu0
        %v260 = vadd.f32 0.0, %v259
        %261 = vdwg.mxu0
        %v263 = vsel %vm232, %v228, 0
        %v266 = vsel %vm232, %v229, 0
        %268 = vmatpush.msra.mxu0 0.0
        %269 = vmatpush.msra.mxu0 0.0
        %270 = vmatpush.msra.mxu0 0.0
        %271 = vmatpush.msra.mxu0 0.0
        %272 = vmatpush.msra.mxu0 0.0
        %273 = vmatpush.msra.mxu0 0.0
        %274 = vmatpush.msra.mxu0 0.0
        %275 = vmatpush.msra.mxu0 0.0
        %276 = vmatpush.msra.mxu0 0.0
        %277 = vmatpush.msra.mxu0 0.0
        %278 = vmatpush.msra.mxu0 0.0
        %279 = vmatpush.msra.mxu0 0.0
        %280 = vmatpush.msra.mxu0 0.0
        %281 = vmatpush.msra.mxu0 0.0
        %282 = vmatpush.msra.mxu0 0.0
        %283 = vmatpush.msra.mxu0 %v224
        %284 = vmatmul.f32.gmra.mxu0 %v263
        %v285 = vpop.f32.mrf.mxu0
        %v286 = vadd.f32 0.0, %v285
        %287 = vmatmul.f32.gmra.mxu0 %v266
        %v288 = vpop.f32.mrf.mxu0
        %v289 = vadd.f32 0.0, %v288
        %290 = vdwg.mxu0
        %v292 = vsel %vm232, %v230, 0
        %v295 = vsel %vm232, %v231, 0
        %297 = vmatpush.msra.mxu0 0.0
        %298 = vmatpush.msra.mxu0 0.0
        %299 = vmatpush.msra.mxu0 0.0
        %300 = vmatpush.msra.mxu0 0.0
        %301 = vmatpush.msra.mxu0 0.0
        %302 = vmatpush.msra.mxu0 0.0
        %303 = vmatpush.msra.mxu0 0.0
        %304 = vmatpush.msra.mxu0 0.0
        %305 = vmatpush.msra.mxu0 0.0
        %306 = vmatpush.msra.mxu0 0.0
        %307 = vmatpush.msra.mxu0 0.0
        %308 = vmatpush.msra.mxu0 0.0
        %309 = vmatpush.msra.mxu0 0.0
        %310 = vmatpush.msra.mxu0 0.0
        %311 = vmatpush.msra.mxu0 0.0
        %312 = vmatpush.msra.mxu0 %v225
        %313 = vmatmul.f32.gmra.mxu0 %v292
        %v314 = vpop.f32.mrf.mxu0
        %v315 = vadd.f32 0.0, %v314
        %316 = vmatmul.f32.gmra.mxu0 %v295
        %v317 = vpop.f32.mrf.mxu0
        %v318 = vadd.f32 0.0, %v317
        %319 = vdwg.mxu0
        %v320 = vld [vmem:[#allocation2] sm:$0xff]
        %v321 = vld [vmem:[#allocation2 + $0x8] sm:$0xff]
        %v322 = vld [vmem:[#allocation2 + $0x10] sm:$0xff]
        %v323 = vld [vmem:[#allocation2 + $0x18] sm:$0xff]
        %v324 = vld [vmem:[#allocation2 + $0x20] sm:$0xff]
        %v325 = vld [vmem:[#allocation2 + $0x28] sm:$0xff]
        %v326 = vld [vmem:[#allocation2 + $0x30] sm:$0xff]
        %v327 = vld [vmem:[#allocation2 + $0x38] sm:$0xff]
        %v328 = vld [vmem:[#allocation2 + $0x40] sm:$0xff]
        %v329 = vld [vmem:[#allocation2 + $0x48] sm:$0xff]
        %v330 = vld [vmem:[#allocation2 + $0x50] sm:$0xff]
        %v331 = vld [vmem:[#allocation2 + $0x58] sm:$0xff]
        %v332 = vld [vmem:[#allocation2 + $0x60] sm:$0xff]
        %v333 = vld [vmem:[#allocation2 + $0x68] sm:$0xff]
        %v334 = vld [vmem:[#allocation2 + $0x70] sm:$0xff]
        %v335 = vld [vmem:[#allocation2 + $0x78] sm:$0xff]
        %vm336 = vcmask 523264
        %v338 = vsel %vm336, %v257, 0
        %v341 = vsel %vm336, %v260, 0
        %v344 = vsel %vm336, %v286, 0
        %v347 = vsel %vm336, %v289, 0
        %v350 = vsel %vm336, %v315, 0
        %v353 = vsel %vm336, %v318, 0
        %355 = vmatpush.msra.mxu0 0.0
        %356 = vmatpush.msra.mxu0 0.0
        %357 = vmatpush.msra.mxu0 0.0
        %358 = vmatpush.msra.mxu0 0.0
        %359 = vmatpush.msra.mxu0 0.0
        %360 = vmatpush.msra.mxu0 0.0
        %361 = vmatpush.msra.mxu0 0.0
        %362 = vmatpush.msra.mxu0 0.0
        %363 = vmatpush.msra.mxu0 %v334
        %364 = vmatpush.msra.mxu0 %v332
        %365 = vmatpush.msra.mxu0 %v330
        %366 = vmatpush.msra.mxu0 %v328
        %367 = vmatpush.msra.mxu0 %v326
        %368 = vmatpush.msra.mxu0 %v324
        %369 = vmatpush.msra.mxu0 %v322
        %370 = vmatpush.msra.mxu0 %v320
        %371 = vmatmul.f32.gmra.mxu0 %v338
        %v372 = vpop.f32.mrf.mxu0
        %v373 = vadd.f32 0.0, %v372
        %374 = vmatmul.f32.gmra.mxu0 %v341
        %v375 = vpop.f32.mrf.mxu0
        %v376 = vadd.f32 0.0, %v375
        %377 = vmatmul.f32.gmra.mxu0 %v344
        %v378 = vpop.f32.mrf.mxu0
        %v379 = vadd.f32 0.0, %v378
        %380 = vmatmul.f32.gmra.mxu0 %v347
        %v381 = vpop.f32.mrf.mxu0
        %v382 = vadd.f32 0.0, %v381
        %383 = vmatmul.f32.gmra.mxu0 %v350
        %v384 = vpop.f32.mrf.mxu0
        %v385 = vadd.f32 0.0, %v384
        %386 = vmatmul.f32.gmra.mxu0 %v353
        %v387 = vpop.f32.mrf.mxu0
        %v388 = vadd.f32 0.0, %v387
        %389 = vdwg.mxu0
        %390 = vmatpush.msra.mxu0 0.0
        %391 = vmatpush.msra.mxu0 0.0
        %392 = vmatpush.msra.mxu0 0.0
        %393 = vmatpush.msra.mxu0 0.0
        %394 = vmatpush.msra.mxu0 0.0
        %395 = vmatpush.msra.mxu0 0.0
        %396 = vmatpush.msra.mxu0 0.0
        %397 = vmatpush.msra.mxu0 0.0
        %398 = vmatpush.msra.mxu0 %v335
        %399 = vmatpush.msra.mxu0 %v333
        %400 = vmatpush.msra.mxu0 %v331
        %401 = vmatpush.msra.mxu0 %v329
        %402 = vmatpush.msra.mxu0 %v327
        %403 = vmatpush.msra.mxu0 %v325
        %404 = vmatpush.msra.mxu0 %v323
        %405 = vmatpush.msra.mxu0 %v321
        %406 = vmatmul.f32.gmra.mxu0 %v338
        %v407 = vpop.f32.mrf.mxu0
        %v408 = vadd.f32 0.0, %v407
        %409 = vmatmul.f32.gmra.mxu0 %v341
        %v410 = vpop.f32.mrf.mxu0
        %v411 = vadd.f32 0.0, %v410
        %412 = vmatmul.f32.gmra.mxu0 %v344
        %v413 = vpop.f32.mrf.mxu0
        %v414 = vadd.f32 0.0, %v413
        %415 = vmatmul.f32.gmra.mxu0 %v347
        %v416 = vpop.f32.mrf.mxu0
        %v417 = vadd.f32 0.0, %v416
        %418 = vmatmul.f32.gmra.mxu0 %v350
        %v419 = vpop.f32.mrf.mxu0
        %v420 = vadd.f32 0.0, %v419
        %421 = vmatmul.f32.gmra.mxu0 %v353
        %v422 = vpop.f32.mrf.mxu0
        %v423 = vadd.f32 0.0, %v422
        %424 = vdwg.mxu0
        %425 = vst [vmem:[%s210] sm:$0xff] %v373
        %426 = vst [vmem:[%s210 + $0x8] sm:$0xff] %v408
        %427 = vst [vmem:[%s210 + $0x10] sm:$0xff] %v376
        %428 = vst [vmem:[%s210 + $0x18] sm:$0xff] %v411
        %429 = vst [vmem:[%s210 + $0x20] sm:$0xff] %v379
        %430 = vst [vmem:[%s210 + $0x28] sm:$0xff] %v414
        %431 = vst [vmem:[%s210 + $0x30] sm:$0xff] %v382
        %432 = vst [vmem:[%s210 + $0x38] sm:$0xff] %v417
        %433 = vst [vmem:[%s210 + $0x40] sm:$0xff] %v385
        %434 = vst [vmem:[%s210 + $0x48] sm:$0xff] %v420
        %435 = vst [vmem:[%s210 + $0x50] sm:$0xff] %v388
        %436 = vst [vmem:[%s210 + $0x58] sm:$0xff] %v423
        %s437 = sand.u32 %s113, 1
        %s438 = scalar_lea.sflag [#allocation4], %s437
        %s439 = sand.u32 %s113, 1
        %s440 = smul.addr %s439, 96
        %s441 = scalar_lea.vmem [#allocation5], %s440
        // Predicated region
        $region37: #{tpu_custom_call.1} parent=31 // pred_check
          %p442 = pneg %p123
        $region38: #{tpu_custom_call.1} parent=31 // pred_check_branch
          %444 = sbr.rel (%p442) target = $region40
        $region39: #{tpu_custom_call.1} parent=31 // pred_region
          %s445 = smul.u32 2, %s23
          %447 = vsyncadd %s438, 0
          %s448 = smul.addr %s445, 2
          %s449 = smul.addr %s22, 12
          %s450 = sadd.s32 %s448, %s449
          %s451 = smul.addr %s450, 8
          %s452 = scalar_lea.hbm %s3, %s451
          %s453 = sshll.u32 %s441, 4
          %s454 = int_to_ptr.vmem [resolvable:$true] %s453
          %s455 = sshll.u32 %s452, 4
          %s456 = int_to_ptr.hbm [resolvable:$true] %s455
          %461 = dma.vmem_to_hbm [thread:$0]  %s454, 1536, %s456, %s438, 256, 256, 16
        $region40: #{tpu_custom_call.1} parent=31 // pred_fallthru
          _
      $region32: #{tpu_custom_call.1} parent=5 // pred_fallthru
        _
      %p462 = scmp.le.s32.totalorder 2, %s13
      // Predicated region
      $region41: #{tpu_custom_call.1} parent=5 // pred_check
        %p463 = pneg %p462
      $region42: #{tpu_custom_call.1} parent=5 // pred_check_branch
        %465 = sbr.rel (%p463) target = $region44
      $region43: #{tpu_custom_call.1} parent=5 // pred_region
        %s466 = ssub.s32 %s13, 2
        // Predicated region
        $region45: #{tpu_custom_call.1} parent=43 // pred_check
          %p467 = pneg %p129
        $region46: #{tpu_custom_call.1} parent=43 // pred_check_branch
          %469 = sbr.rel (%p467) target = $region48
        $region47: #{tpu_custom_call.1} parent=43 // pred_region
          %s470 = sand.u32 %s114, 1
          %s471 = scalar_lea.sflag [#allocation4], %s470
          %s472 = sand.u32 %s114, 1
          %s473 = smul.addr %s472, 96
          %s474 = scalar_lea.vmem [#allocation5], %s473
          %476 = dma.done %s471, 1536
        $region48: #{tpu_custom_call.1} parent=43 // pred_fallthru
          _
      $region44: #{tpu_custom_call.1} parent=5 // pred_fallthru
        _
    $region6: #{tpu_custom_call.1} parent=1 // loop_footer
      %s17 = sadd.s32 1, %s13
    $region7: #{tpu_custom_call.1} parent=1 // loop_footer_branch
      %12 = sbr.rel target = $region3
    $region8: #{tpu_custom_call.1} parent=1 // loop_exit
      _
    %477 = vsyncpa [#allocation3], 1
    %s478 = scalar_lea.sflag [#allocation3], 1
    %479 = vsyncpa %s478, 1
    %480 = vsyncpa [#allocation4], 1
    %s481 = scalar_lea.sflag [#allocation4], 1
    %482 = vsyncpa %s481, 1

</llo_original>
